<compile_context>
chip_gen: v7x
topology: tpu7x:2x2x1
jax: 0.10.0
libtpu: 0.0.40
codegen_flags: <defaults>
</compile_context>

<pallas_src>
import jax
import jax.numpy as jnp
from jax.experimental import pallas as pl
from jax.experimental.pallas import tpu as pltpu

HIDDEN = 32                     # RealFunction(32, 32)
_VMEM_BUDGET = 24 << 20         # conservative: v7x has 64 MiB phys / 32 MiB scoped


def _round_up(x, m):
    return (x + m - 1) // m * m


# --------------------------- kernel 1: basis -------------------------------- #

def _basis_kernel(t_ref, w1_ref, b1_ref, w2_ref, b2_ref, w3_ref, b3_ref,
                  basis_ref):
    """K per-basis MLPs batched over KH = K*H lanes; runs exactly once."""
    t = t_ref[...]                                               # (T, 1) f32
    # Layer 1 Linear(1->H) for all K bases: outer-product broadcast.
    h = jnp.tanh(t * w1_ref[...] + b1_ref[...])                  # (T, KH)
    # Layer 2 Linear(H->H): one block-diagonal (KH, KH) MXU matmul.
    h = jnp.tanh(
        jnp.dot(h, w2_ref[...], preferred_element_type=jnp.float32)
        + b2_ref[...])                                           # (T, KH)
    # Layer 3 Linear(H->1) heads folded into a single (KH, K) matmul.
    o = jnp.dot(h, w3_ref[...], preferred_element_type=jnp.float32) + b3_ref[...]
    o = jax.nn.sigmoid(o)                                        # (T, K)
    # get_basis: per-basis b / (max over times + 1e-6), vectorized over K.
    mx = jnp.max(o, axis=0, keepdims=True)                       # (1, K)
    basis_ref[...] = o / (mx + 1e-6)                             # exact divide


# ---------------------- kernel 2: trajectory contraction -------------------- #

def _traj_kernel(basis_ref, betas_ref, scales_ref, traj_ref):
    """(betas * gene_scales) contracted with basis over K; C*G on lanes."""
    scaled = betas_ref[...] * scales_ref[...]                    # (K, cgb)
    traj_ref[...] = jnp.dot(basis_ref[...], scaled,
                            preferred_element_type=jnp.float32)  # (T, cgb)


# ----------------------------- wrappers ------------------------------------ #

def pack_params(params):
    """Pack per-basis MLP weights into the lane-packed / block-diagonal layout."""
    K, H = params["w1"].shape
    KH = K * H
    eye = jnp.eye(K, dtype=jnp.float32)
    w1_row = params["w1"].reshape(1, KH).astype(jnp.float32)
    b1_row = params["b1"].reshape(1, KH).astype(jnp.float32)
    # (K, H, H) in (in, out) orientation -> block-diagonal (KH, KH)
    w2_bd = jnp.einsum("kab,kl->kalb", params["w2"].astype(jnp.float32),
                       eye).reshape(KH, KH)
    b2_row = params["b2"].reshape(1, KH).astype(jnp.float32)
    # (K, H) per-basis output weights -> (KH, K), column k nonzero in rows k*H:(k+1)*H
    w3_mat = jnp.einsum("ka,kl->kal", params["w3"].astype(jnp.float32),
                        eye).reshape(KH, K)
    b3_row = params["b3"].reshape(1, K).astype(jnp.float32)
    return {"w1": w1_row, "b1": b1_row, "w2": w2_bd, "b2": b2_row,
            "w3": w3_mat, "b3": b3_row}


def _traj_vmem_bytes(T, K, cgb):
    """Estimated VMEM footprint of the trajectory call's blocks (f32)."""
    pad8 = lambda n: _round_up(max(n, 1), 8)
    f = 4
    basis = pad8(T) * _round_up(K, 128) * f          # resident basis input
    betas = 3 * pad8(K) * cgb * f                    # Buffered(3) streamed
    scales = 3 * pad8(1) * cgb * f                   # Buffered(3) streamed
    out = 2 * pad8(T) * cgb * f                      # double-buffered output
    return basis + betas + scales + out


def trajectory_model_forward(times, data, packed, betas, gene_scales,
                             cg_block=2048):
    """Deterministic replica of TrajectoryModel.forward (normalized_mode=True).

    Returns (basis, trajectories); the PyTorch module returns basis when
    return_basis=True, trajectories otherwise -- both are produced here.
    """
    # TODO(synk): pyro.sample('obs', Normal(trajectories, std), obs=data) and the
    # c/g/t pyro.plate context are likelihood-only; no forward-output equivalent.
    del data

    t2 = times.reshape(-1, 1).astype(jnp.float32)                # x.view(-1, 1)
    T = t2.shape[0]
    C, G, K = betas.shape
    CG = C * G

    # ---- basis: computed ONCE in a grid-less call (no per-block recompute) ----
    # TODO(synk): for very large T (>= ~512) chunk the MLP over T in a fori_loop
    # to bound vreg live ranges; unnecessary at these sizes.
    basis = pl.pallas_call(
        _basis_kernel,
        out_shape=jax.ShapeDtypeStruct((T, K), jnp.float32),
    )(t2, packed["w1"], packed["b1"], packed["w2"], packed["b2"],
      packed["w3"], packed["b3"])

    # ---- trajectories: lane-flipped layout, C*G on the 128-lane axis ---------
    betas_t = betas.reshape(CG, K).T.astype(jnp.float32)          # (K, CG)
    scales_t = gene_scales.reshape(1, CG).astype(jnp.float32)     # (1, CG)

    # Block size: multiple of 128 lanes, capped by cg_block, shrunk to the
    # VMEM budget (keeps the same code VMEM-safe on v7x's smaller VMEM).
    cgb = min(_round_up(CG, 128), max(_round_up(cg_block, 128), 128))
    while cgb > 128 and _traj_vmem_bytes(T, K, cgb) > _VMEM_BUDGET:
        cgb -= 128
    cg_pad = _round_up(CG, cgb)
    if cg_pad != CG:
        betas_t = jnp.pad(betas_t, ((0, 0), (0, cg_pad - CG)))
        scales_t = jnp.pad(scales_t, ((0, 0), (0, cg_pad - CG)))
    nblk = cg_pad // cgb

    # Deeper pipelining on streamed operands once there are enough grid steps.
    def _stream_spec(shape, index_map):
        if nblk >= 3:
            return pl.BlockSpec(shape, index_map, pipeline_mode=pl.Buffered(3))
        return pl.BlockSpec(shape, index_map)

    vmem_limit = int(min(max(_traj_vmem_bytes(T, K, cgb) + (8 << 20), 32 << 20),
                         48 << 20))

    traj_t = pl.pallas_call(
        _traj_kernel,
        out_shape=jax.ShapeDtypeStruct((T, cg_pad), jnp.float32),
        grid_spec=pltpu.PrefetchScalarGridSpec(
            num_scalar_prefetch=0,
            grid=(nblk,),
            in_specs=[
                pl.BlockSpec((T, K), lambda i: (0, 0)),        # basis, resident
                _stream_spec((K, cgb), lambda i: (0, i)),      # betas^T block
                _stream_spec((1, cgb), lambda i: (0, i)),      # gene_scales block
            ],
            out_specs=pl.BlockSpec((T, cgb), lambda i: (0, i)),  # lane-dense (T,cgb)
        ),
        compiler_params=pltpu.CompilerParams(
            # No cross-block write hazard (basis is read-only input) -> parallel,
            # so v7x can shard the C*G axis across its two TensorCores.
            dimension_semantics=("parallel",),
            vmem_limit_bytes=vmem_limit,
        ),
    )(basis, betas_t, scales_t)

    trajectories = traj_t[:, :CG].T.reshape(C, G, T)
    return basis, trajectories


# ----------------------------- parameter init ------------------------------ #

def init_params(key, K, hidden=HIDDEN):
    """RealFunction(32, 32) priors: Normal(0, 1/sqrt(in_features)) per layer."""
    ks = jax.random.split(key, 6)
    s_in1 = 1.0                      # 1 / sqrt(1)
    s_inH = 1.0 / hidden ** 0.5      # 1 / sqrt(32)
    w1 = (jax.random.normal(ks[0], (K, hidden)) * s_in1).astype(jnp.float32)
    b1 = (jax.random.normal(ks[1], (K, hidden)) * s_in1).astype(jnp.float32)
    w2_pt = jax.random.normal(ks[2], (K, hidden, hidden)) * s_inH   # (out, in)
    w2 = jnp.swapaxes(w2_pt, -1, -2).astype(jnp.float32)            # -> (in, out)
    b2 = (jax.random.normal(ks[3], (K, hidden)) * s_inH).astype(jnp.float32)
    w3 = (jax.random.normal(ks[4], (K, hidden)) * s_inH).astype(jnp.float32)
    b3 = (jax.random.normal(ks[5], (K, 1)) * s_inH).astype(jnp.float32)
    return {"w1": w1, "b1": b1, "w2": w2, "b2": b2, "w3": w3, "b3": b3}


# ----------------------------- pure-JAX reference --------------------------- #

def _reference(times, params, betas, gene_scales):
    t2 = times.reshape(-1, 1).astype(jnp.float32)
    K = params["w1"].shape[0]
    cols = []
    for k in range(K):
        h = jnp.tanh(t2 * params["w1"][k][None, :] + params["b1"][k][None, :])
        h = jnp.tanh(h @ params["w2"][k] + params["b2"][k][None, :])
        o = jax.nn.sigmoid(h @ params["w3"][k][:, None] + params["b3"][k][None, :])
        cols.append(o / (jnp.max(o) + 1e-6))
    basis = jnp.concatenate(cols, axis=1)                       # (T, K)
    scaled = betas * gene_scales[..., None]                     # (C, G, K)
    traj = jnp.einsum("cgk,tk->cgt", scaled, basis)             # (C, G, T)
    return basis, traj


# ----------------------------- main ----------------------------------------- #

if __name__ == "__main__":
    key = jax.random.PRNGKey(0)
    K = 4

    k_params, k_beta, k_data, k_beta2 = jax.random.split(key, 4)
    params = init_params(k_params, K)
    packed = pack_params(params)

    # --- small demo shape (single C*G block) -------------------------------
    n_conditions, n_genes, T = 2, 16, 8
    times = jnp.linspace(0.0, 1.0, T, dtype=jnp.float32)

    # pyro.sample('beta', Dirichlet(ones(K) * beta_prior).expand([C, G])):
    betas = jax.random.dirichlet(
        k_beta, jnp.ones((K,), jnp.float32),
        shape=(n_conditions, n_genes)).astype(jnp.float32)      # (C, G, K)
    # gene_scales = exp(pyro.param('gene_scale', zeros(C, G))) = ones
    gene_scales = jnp.exp(jnp.zeros((n_conditions, n_genes), jnp.float32))
    data = jax.random.normal(k_data, (n_conditions, n_genes, T),
                             dtype=jnp.float32)                 # observed data

    basis, traj = trajectory_model_forward(times, data, packed, betas,
                                           gene_scales)
    jax.block_until_ready((basis, traj))
    assert basis.shape == (T, K)
    assert traj.shape == (n_conditions, n_genes, T)

    ref_basis, ref_traj = _reference(times, params, betas, gene_scales)
    assert jnp.allclose(basis, ref_basis, rtol=1e-2, atol=1e-2)
    assert jnp.allclose(traj, ref_traj, rtol=1e-2, atol=1e-2)

    # --- multi-block path: exercises streaming grid, padding, Buffered(3) ---
    n_genes2 = 200                                  # CG = 400 -> 4 blocks of 128
    betas2 = jax.random.dirichlet(
        k_beta2, jnp.ones((K,), jnp.float32),
        shape=(n_conditions, n_genes2)).astype(jnp.float32)
    gene_scales2 = jnp.exp(jnp.zeros((n_conditions, n_genes2), jnp.float32))
    data2 = jnp.zeros((n_conditions, n_genes2, T), jnp.float32)

    basis2, traj2 = trajectory_model_forward(times, data2, packed, betas2,
                                             gene_scales2, cg_block=128)
    jax.block_until_ready((basis2, traj2))
    ref_basis2, ref_traj2 = _reference(times, params, betas2, gene_scales2)
    assert jnp.allclose(basis2, ref_basis2, rtol=1e-2, atol=1e-2)
    assert jnp.allclose(traj2, ref_traj2, rtol=1e-2, atol=1e-2)

    print("KERNEL_OK")
</pallas_src>

<mosaic_0001>
module attributes {stable_mosaic.version = 11 : i64} {
  func.func @_basis_kernel(%arg0: memref<8x1xf32, #tpu.memory_space<vmem>>, %arg1: memref<1x128xf32, #tpu.memory_space<vmem>>, %arg2: memref<1x128xf32, #tpu.memory_space<vmem>>, %arg3: memref<128x128xf32, #tpu.memory_space<vmem>>, %arg4: memref<1x128xf32, #tpu.memory_space<vmem>>, %arg5: memref<128x4xf32, #tpu.memory_space<vmem>>, %arg6: memref<1x4xf32, #tpu.memory_space<vmem>>, %arg7: memref<8x4xf32, #tpu.memory_space<vmem>>) attributes {dimension_semantics = [], scalar_prefetch = 0 : i64, scratch_operands = 0 : i64, tpu.core_type = #tpu.core_type<tc>} {
    %c0 = arith.constant 0 : index
    %c0_0 = arith.constant 0 : index
    %0 = vector.load %arg0[%c0, %c0_0] : memref<8x1xf32, #tpu.memory_space<vmem>>, vector<8x1xf32>
    %c0_1 = arith.constant 0 : index
    %c0_2 = arith.constant 0 : index
    %1 = vector.load %arg1[%c0_1, %c0_2] : memref<1x128xf32, #tpu.memory_space<vmem>>, vector<1x128xf32>
    %2 = vector.broadcast %0 : vector<8x1xf32> to vector<8x128xf32>
    %3 = vector.broadcast %1 : vector<1x128xf32> to vector<8x128xf32>
    %4 = arith.mulf %2, %3 : vector<8x128xf32>
    %c0_3 = arith.constant 0 : index
    %c0_4 = arith.constant 0 : index
    %5 = vector.load %arg2[%c0_3, %c0_4] : memref<1x128xf32, #tpu.memory_space<vmem>>, vector<1x128xf32>
    %6 = vector.broadcast %5 : vector<1x128xf32> to vector<8x128xf32>
    %7 = arith.addf %4, %6 : vector<8x128xf32>
    %8 = math.tanh %7 : vector<8x128xf32>
    %c0_5 = arith.constant 0 : index
    %c0_6 = arith.constant 0 : index
    %9 = vector.load %arg3[%c0_5, %c0_6] : memref<128x128xf32, #tpu.memory_space<vmem>>, vector<128x128xf32>
    %cst = arith.constant dense<0.000000e+00> : vector<8x128xf32>
    %10 = tpu.matmul %8, %9, %cst {dimension_numbers = #tpu.dot_dimension_numbers<[1], [0], [0], [1], [0, 0, 1, 1], [], []>} : vector<8x128xf32>, vector<128x128xf32>, vector<8x128xf32> -> vector<8x128xf32>
    %c0_7 = arith.constant 0 : index
    %c0_8 = arith.constant 0 : index
    %11 = vector.load %arg4[%c0_7, %c0_8] : memref<1x128xf32, #tpu.memory_space<vmem>>, vector<1x128xf32>
    %12 = vector.broadcast %11 : vector<1x128xf32> to vector<8x128xf32>
    %13 = arith.addf %10, %12 : vector<8x128xf32>
    %14 = math.tanh %13 : vector<8x128xf32>
    %c0_9 = arith.constant 0 : index
    %c0_10 = arith.constant 0 : index
    %15 = vector.load %arg5[%c0_9, %c0_10] : memref<128x4xf32, #tpu.memory_space<vmem>>, vector<128x4xf32>
    %cst_11 = arith.constant dense<0.000000e+00> : vector<8x4xf32>
    %16 = tpu.matmul %14, %15, %cst_11 {dimension_numbers = #tpu.dot_dimension_numbers<[1], [0], [0], [1], [0, 0, 1, 1], [], []>} : vector<8x128xf32>, vector<128x4xf32>, vector<8x4xf32> -> vector<8x4xf32>
    %c0_12 = arith.constant 0 : index
    %c0_13 = arith.constant 0 : index
    %17 = vector.load %arg6[%c0_12, %c0_13] : memref<1x4xf32, #tpu.memory_space<vmem>>, vector<1x4xf32>
    %18 = vector.broadcast %17 : vector<1x4xf32> to vector<8x4xf32>
    %19 = arith.addf %16, %18 : vector<8x4xf32>
    %20 = arith.negf %19 : vector<8x4xf32>
    %21 = math.exp %20 : vector<8x4xf32>
    %cst_14 = arith.constant 1.000000e+00 : f32
    %22 = vector.broadcast %cst_14 : f32 to vector<8x4xf32>
    %23 = arith.addf %22, %21 : vector<8x4xf32>
    %24 = arith.divf %22, %23 : vector<8x4xf32>
    %cst_15 = arith.constant dense<0xFF800000> : vector<4xf32>
    %25 = vector.multi_reduction <maximumf>, %24, %cst_15 [0] : vector<8x4xf32> to vector<4xf32>
    %26 = vector.shape_cast %25 : vector<4xf32> to vector<1x4xf32>
    %cst_16 = arith.constant 9.99999997E-7 : f32
    %27 = vector.broadcast %cst_16 : f32 to vector<1x4xf32>
    %28 = arith.addf %26, %27 : vector<1x4xf32>
    %29 = vector.broadcast %28 : vector<1x4xf32> to vector<8x4xf32>
    %30 = arith.divf %24, %29 : vector<8x4xf32>
    %c0_17 = arith.constant 0 : index
    %c0_18 = arith.constant 0 : index
    %31 = vector.load %arg7[%c0_17, %c0_18] : memref<8x4xf32, #tpu.memory_space<vmem>>, vector<8x4xf32>
    tpu.vector_store %arg7[%c0_17, %c0_18], %30 {strides = array<i32>} : memref<8x4xf32, #tpu.memory_space<vmem>>, vector<8x4xf32>,
    return
  }
}

</mosaic_0001>

<llo_original>
// kernel: tpu_custom_call.1
$region0: #{tpu_custom_call.1}
  #allocation0 [shape = 'u32[]', space=smem, size = 0x4, offset = 0x4, fixed_abs, tag = 'smem constant byte address 0x4 - core index']
  #allocation1 [shape = 'u32[144,128]{1,0:T(1,128)}', space=vmem, size = 0x12000, scoped, tag = 'internal scratch']
  %s0 = inlined_call_operand.vmem [shape: f32[8,1], index: 0, kind: input, shape index: {}]
  %s1 = inlined_call_operand.vmem [shape: f32[1,128], index: 1, kind: input, shape index: {}]
  %s2 = inlined_call_operand.vmem [shape: f32[1,128], index: 2, kind: input, shape index: {}]
  %s3 = inlined_call_operand.vmem [shape: f32[128,128], index: 3, kind: input, shape index: {}]
  %s4 = inlined_call_operand.vmem [shape: f32[1,128], index: 4, kind: input, shape index: {}]
  %s5 = inlined_call_operand.vmem [shape: f32[128,4], index: 5, kind: input, shape index: {}]
  %s6 = inlined_call_operand.vmem [shape: f32[1,4], index: 6, kind: input, shape index: {}]
  %s7 = inlined_call_operand.vmem [shape: f32[8,4], index: 7, kind: output, shape index: {}]
  %s8 = sld [smem:[#allocation0]]
  $region38: #{tpu_custom_call.1} parent=0
    _
  %s10 = ssub.s32 1, %s8
  %s11 = scalar_select 0, %s10, %s8
  // Predicated region
  $region2: #{tpu_custom_call.1} parent=0 // pred_check
    _
  $region3: #{tpu_custom_call.1} parent=0 // pred_check_branch
    %13 = sbr.rel (0) target = $region5
  $region4: #{tpu_custom_call.1} parent=0 // pred_region
    _
  $region5: #{tpu_custom_call.1} parent=0 // pred_fallthru
    _
  // Predicated region
  $region6: #{tpu_custom_call.1} parent=0 // pred_check
    _
  $region7: #{tpu_custom_call.1} parent=0 // pred_check_branch
    %15 = sbr.rel (0) target = $region9
  $region8: #{tpu_custom_call.1} parent=0 // pred_region
    _
  $region9: #{tpu_custom_call.1} parent=0 // pred_fallthru
    _
  // Predicated region
  $region10: #{tpu_custom_call.1} parent=0 // pred_check
    _
  $region11: #{tpu_custom_call.1} parent=0 // pred_check_branch
    %17 = sbr.rel (0) target = $region13
  $region12: #{tpu_custom_call.1} parent=0 // pred_region
    _
  $region13: #{tpu_custom_call.1} parent=0 // pred_fallthru
    _
  // Predicated region
  $region14: #{tpu_custom_call.1} parent=0 // pred_check
    _
  $region15: #{tpu_custom_call.1} parent=0 // pred_check_branch
    %19 = sbr.rel (0) target = $region17
  $region16: #{tpu_custom_call.1} parent=0 // pred_region
    _
  $region17: #{tpu_custom_call.1} parent=0 // pred_fallthru
    _
  // Predicated region
  $region18: #{tpu_custom_call.1} parent=0 // pred_check
    _
  $region19: #{tpu_custom_call.1} parent=0 // pred_check_branch
    %21 = sbr.rel (0) target = $region21
  $region20: #{tpu_custom_call.1} parent=0 // pred_region
    _
  $region21: #{tpu_custom_call.1} parent=0 // pred_fallthru
    _
  // Predicated region
  $region22: #{tpu_custom_call.1} parent=0 // pred_check
    _
  $region23: #{tpu_custom_call.1} parent=0 // pred_check_branch
    %23 = sbr.rel (0) target = $region25
  $region24: #{tpu_custom_call.1} parent=0 // pred_region
    _
  $region25: #{tpu_custom_call.1} parent=0 // pred_fallthru
    _
  // Predicated region
  $region26: #{tpu_custom_call.1} parent=0 // pred_check
    _
  $region27: #{tpu_custom_call.1} parent=0 // pred_check_branch
    %25 = sbr.rel (0) target = $region29
  $region28: #{tpu_custom_call.1} parent=0 // pred_region
    _
  $region29: #{tpu_custom_call.1} parent=0 // pred_fallthru
    _
  %v26 = vld [vmem:[%s0] sm:$0xff]
  %v27 = vld [vmem:[%s1] sm:$0x1]
  %29 = vset.pattern.permute.xlu0 0
  %30 = vperm.xlu0 %29, %v26
  %v31 = vpop.permute.xlu0 %30
  %v34 = vlaneseq
  %v35 = vshrl.u32 %v34, 7
  %v36 = vsub.s32 0, %v35
  %v37 = vrot.slane %v27, %v36
  %v39 = vmul.f32 %v31, %v37
  %v40 = vld [vmem:[%s2] sm:$0x1]
  %v42 = vlaneseq
  %v43 = vshrl.u32 %v42, 7
  %v44 = vsub.s32 0, %v43
  %v45 = vrot.slane %v40, %v44
  %v47 = vadd.f32 %v39, %v45
  %v48 = vtanh.pop %v47
  %v49 = vld [vmem:[%s3] sm:$0xff]
  %v50 = vld [vmem:[%s3 + $0x8] sm:$0xff]
  %v51 = vld [vmem:[%s3 + $0x10] sm:$0xff]
  %v52 = vld [vmem:[%s3 + $0x18] sm:$0xff]
  %v53 = vld [vmem:[%s3 + $0x20] sm:$0xff]
  %v54 = vld [vmem:[%s3 + $0x28] sm:$0xff]
  %v55 = vld [vmem:[%s3 + $0x30] sm:$0xff]
  %v56 = vld [vmem:[%s3 + $0x38] sm:$0xff]
  %v57 = vld [vmem:[%s3 + $0x40] sm:$0xff]
  %v58 = vld [vmem:[%s3 + $0x48] sm:$0xff]
  %v59 = vld [vmem:[%s3 + $0x50] sm:$0xff]
  %v60 = vld [vmem:[%s3 + $0x58] sm:$0xff]
  %v61 = vld [vmem:[%s3 + $0x60] sm:$0xff]
  %v62 = vld [vmem:[%s3 + $0x68] sm:$0xff]
  %v63 = vld [vmem:[%s3 + $0x70] sm:$0xff]
  %v64 = vld [vmem:[%s3 + $0x78] sm:$0xff]
  %v65 = vld [vmem:[%s4] sm:$0x1]
  %v67 = vlaneseq
  %v68 = vshrl.u32 %v67, 7
  %v69 = vsub.s32 0, %v68
  %v70 = vrot.slane %v65, %v69
  %72 = vmatprep.subr.mxu0 0.0
  %73 = vmatpush1.msra.mxu0 %v49
  %74 = vmatprep.subr.mxu0 0.0
  %75 = vmatpush1.msra.mxu0 %v50
  %76 = vmatprep.subr.mxu0 0.0
  %77 = vmatpush1.msra.mxu0 %v51
  %78 = vmatprep.subr.mxu0 0.0
  %79 = vmatpush1.msra.mxu0 %v52
  %80 = vmatprep.subr.mxu0 0.0
  %81 = vmatpush1.msra.mxu0 %v53
  %82 = vmatprep.subr.mxu0 0.0
  %83 = vmatpush1.msra.mxu0 %v54
  %84 = vmatprep.subr.mxu0 0.0
  %85 = vmatpush1.msra.mxu0 %v55
  %86 = vmatprep.subr.mxu0 0.0
  %87 = vmatpush1.msra.mxu0 %v56
  %88 = vmatprep.subr.mxu0 0.0
  %89 = vmatpush1.msra.mxu0 %v57
  %90 = vmatprep.subr.mxu0 0.0
  %91 = vmatpush1.msra.mxu0 %v58
  %92 = vmatprep.subr.mxu0 0.0
  %93 = vmatpush1.msra.mxu0 %v59
  %94 = vmatprep.subr.mxu0 0.0
  %95 = vmatpush1.msra.mxu0 %v60
  %96 = vmatprep.subr.mxu0 0.0
  %97 = vmatpush1.msra.mxu0 %v61
  %98 = vmatprep.subr.mxu0 0.0
  %99 = vmatpush1.msra.mxu0 %v62
  %100 = vmatprep.subr.mxu0 0.0
  %101 = vmatpush1.msra.mxu0 %v63
  %102 = vmatprep.subr.mxu0 0.0
  %103 = vmatpush1.msra.mxu0 %v64
  %104 = vmatprep.subr.mxu0 0.0
  %105 = vmatpush1.msra.mxu0 0.0
  %106 = vmatprep.subr.mxu0 0.0
  %107 = vmatpush1.msra.mxu0 0.0
  %108 = vmatprep.subr.mxu0 0.0
  %109 = vmatpush1.msra.mxu0 0.0
  %110 = vmatprep.subr.mxu0 0.0
  %111 = vmatpush1.msra.mxu0 0.0
  %112 = vmatprep.subr.mxu0 0.0
  %113 = vmatpush1.msra.mxu0 0.0
  %114 = vmatprep.subr.mxu0 0.0
  %115 = vmatpush1.msra.mxu0 0.0
  %116 = vmatprep.subr.mxu0 0.0
  %117 = vmatpush1.msra.mxu0 0.0
  %118 = vmatprep.subr.mxu0 0.0
  %119 = vmatpush1.msra.mxu0 0.0
  %120 = vmatprep.subr.mxu0 0.0
  %121 = vmatpush1.msra.mxu0 0.0
  %122 = vmatprep.subr.mxu0 0.0
  %123 = vmatpush1.msra.mxu0 0.0
  %124 = vmatprep.subr.mxu0 0.0
  %125 = vmatpush1.msra.mxu0 0.0
  %126 = vmatprep.subr.mxu0 0.0
  %127 = vmatpush1.msra.mxu0 0.0
  %128 = vmatprep.subr.mxu0 0.0
  %129 = vmatpush1.msra.mxu0 0.0
  %130 = vmatprep.subr.mxu0 0.0
  %131 = vmatpush1.msra.mxu0 0.0
  %132 = vmatprep.subr.mxu0 0.0
  %133 = vmatpush1.msra.mxu0 0.0
  %134 = vmatprep.subr.mxu0 0.0
  %135 = vmatpush1.msra.mxu0 0.0
  %136 = vmatprep.mubr.f32.mxu0 0.0
  %137 = vmatmul.mubr.f32.gmra.mrb[0].mxu0 %v48
  %v138 = vpop.f32.mrb[0].mxu0
  %v139 = vadd.f32 %v70, %v138
  %v140 = vpop.f32.mrb[0].mxu0
  %141 = vdwg.mxu0
  %v142 = vtanh.pop %v139
  %v143 = vld [vmem:[%s5] sm:$0xff]
  %v144 = vld [vmem:[%s5 + $0x8] sm:$0xff]
  %v145 = vld [vmem:[%s5 + $0x10] sm:$0xff]
  %v146 = vld [vmem:[%s5 + $0x18] sm:$0xff]
  %v147 = vld [vmem:[%s5 + $0x20] sm:$0xff]
  %v148 = vld [vmem:[%s5 + $0x28] sm:$0xff]
  %v149 = vld [vmem:[%s5 + $0x30] sm:$0xff]
  %v150 = vld [vmem:[%s5 + $0x38] sm:$0xff]
  %v151 = vld [vmem:[%s5 + $0x40] sm:$0xff]
  %v152 = vld [vmem:[%s5 + $0x48] sm:$0xff]
  %v153 = vld [vmem:[%s5 + $0x50] sm:$0xff]
  %v154 = vld [vmem:[%s5 + $0x58] sm:$0xff]
  %v155 = vld [vmem:[%s5 + $0x60] sm:$0xff]
  %v156 = vld [vmem:[%s5 + $0x68] sm:$0xff]
  %v157 = vld [vmem:[%s5 + $0x70] sm:$0xff]
  %v158 = vld [vmem:[%s5 + $0x78] sm:$0xff]
  %v159 = vld [vmem:[%s6] sm:$0x1]
  %v161 = vlaneseq
  %v162 = vshrl.u32 %v161, 7
  %v163 = vsub.s32 0, %v162
  %v164 = vrot.slane %v159, %v163
  %166 = vmatprep.subr.mxu0 0.0
  %167 = vmatpush1.msra.mxu0 %v143
  %168 = vmatprep.subr.mxu0 0.0
  %169 = vmatpush1.msra.mxu0 %v144
  %170 = vmatprep.subr.mxu0 0.0
  %171 = vmatpush1.msra.mxu0 %v145
  %172 = vmatprep.subr.mxu0 0.0
  %173 = vmatpush1.msra.mxu0 %v146
  %174 = vmatprep.subr.mxu0 0.0
  %175 = vmatpush1.msra.mxu0 %v147
  %176 = vmatprep.subr.mxu0 0.0
  %177 = vmatpush1.msra.mxu0 %v148
  %178 = vmatprep.subr.mxu0 0.0
  %179 = vmatpush1.msra.mxu0 %v149
  %180 = vmatprep.subr.mxu0 0.0
  %181 = vmatpush1.msra.mxu0 %v150
  %182 = vmatprep.subr.mxu0 0.0
  %183 = vmatpush1.msra.mxu0 %v151
  %184 = vmatprep.subr.mxu0 0.0
  %185 = vmatpush1.msra.mxu0 %v152
  %186 = vmatprep.subr.mxu0 0.0
  %187 = vmatpush1.msra.mxu0 %v153
  %188 = vmatprep.subr.mxu0 0.0
  %189 = vmatpush1.msra.mxu0 %v154
  %190 = vmatprep.subr.mxu0 0.0
  %191 = vmatpush1.msra.mxu0 %v155
  %192 = vmatprep.subr.mxu0 0.0
  %193 = vmatpush1.msra.mxu0 %v156
  %194 = vmatprep.subr.mxu0 0.0
  %195 = vmatpush1.msra.mxu0 %v157
  %196 = vmatprep.subr.mxu0 0.0
  %197 = vmatpush1.msra.mxu0 %v158
  %198 = vmatprep.subr.mxu0 0.0
  %199 = vmatpush1.msra.mxu0 0.0
  %200 = vmatprep.subr.mxu0 0.0
  %201 = vmatpush1.msra.mxu0 0.0
  %202 = vmatprep.subr.mxu0 0.0
  %203 = vmatpush1.msra.mxu0 0.0
  %204 = vmatprep.subr.mxu0 0.0
  %205 = vmatpush1.msra.mxu0 0.0
  %206 = vmatprep.subr.mxu0 0.0
  %207 = vmatpush1.msra.mxu0 0.0
  %208 = vmatprep.subr.mxu0 0.0
  %209 = vmatpush1.msra.mxu0 0.0
  %210 = vmatprep.subr.mxu0 0.0
  %211 = vmatpush1.msra.mxu0 0.0
  %212 = vmatprep.subr.mxu0 0.0
  %213 = vmatpush1.msra.mxu0 0.0
  %214 = vmatprep.subr.mxu0 0.0
  %215 = vmatpush1.msra.mxu0 0.0
  %216 = vmatprep.subr.mxu0 0.0
  %217 = vmatpush1.msra.mxu0 0.0
  %218 = vmatprep.subr.mxu0 0.0
  %219 = vmatpush1.msra.mxu0 0.0
  %220 = vmatprep.subr.mxu0 0.0
  %221 = vmatpush1.msra.mxu0 0.0
  %222 = vmatprep.subr.mxu0 0.0
  %223 = vmatpush1.msra.mxu0 0.0
  %224 = vmatprep.subr.mxu0 0.0
  %225 = vmatpush1.msra.mxu0 0.0
  %226 = vmatprep.subr.mxu0 0.0
  %227 = vmatpush1.msra.mxu0 0.0
  %228 = vmatprep.subr.mxu0 0.0
  %229 = vmatpush1.msra.mxu0 0.0
  %230 = vmatprep.mubr.f32.mxu0 0.0
  %231 = vmatmul.mubr.f32.gmra.mrb[0].mxu0 %v142
  %v232 = vpop.f32.mrb[0].mxu0
  %v233 = vadd.f32 %v164, %v232
  %v234 = vpop.f32.mrb[0].mxu0
  %235 = vdwg.mxu0
  %v236 = vxor.u32 %v233, 2147483648
  %v237 = vmul.f32 %v236, 1.442695
  %v238 = vpow.pop %v237
  %v239 = vadd.f32 %v238, 1.0
  %v240 = vrcp.pop %v239
  %v241 = vmul.f32 1.0, %v240
  %vm242 = vcmask 31744
  %v243 = vsel %vm242, %v241, -inf
  %v244 = vrot.slane %v243, 4
  %v245 = vmax.f32 %v243, %v244
  %v246 = vrot.slane %v245, 2
  %v247 = vmax.f32 %v245, %v246
  %v248 = vrot.slane %v247, 1
  %v249 = vmax.f32 %v247, %v248
  %v250 = vadd.f32 %v249, 1e-06
  %v251 = vrcp.pop %v250
  %v252 = vmul.f32 %v241, %v251
  %253 = vst.msk [vmem:[%s7] sm:$0xff] %vm242, %v252
  // Predicated region
  $region30: #{tpu_custom_call.1} parent=0 // pred_check
    _
  $region31: #{tpu_custom_call.1} parent=0 // pred_check_branch
    %255 = sbr.rel (0) target = $region33
  $region32: #{tpu_custom_call.1} parent=0 // pred_region
    _
  $region33: #{tpu_custom_call.1} parent=0 // pred_fallthru
    _
  // Predicated region
  $region34: #{tpu_custom_call.1} parent=0 // pred_check
    _
  $region35: #{tpu_custom_call.1} parent=0 // pred_check_branch
    %257 = sbr.rel (0) target = $region37
  $region36: #{tpu_custom_call.1} parent=0 // pred_region
    _
  $region37: #{tpu_custom_call.1} parent=0 // pred_fallthru
    _

</llo_original>
